<compile_context>
chip_gen: v5e
topology: v5e:2x2
jax: 0.10.0
libtpu: 0.0.40
codegen_flags: <defaults>
</compile_context>

<pallas_src>
import functools

import jax
import jax.numpy as jnp
from jax.experimental import pallas as pl
from jax.experimental.pallas import tpu as pltpu

_LANE = 128


def _pad_axis(a, axis, mult):
    pad = (-a.shape[axis]) % mult
    if pad == 0:
        return a
    widths = [(0, 0)] * a.ndim
    widths[axis] = (0, pad)
    return jnp.pad(a, widths)


def _choose_tb(batch, tb_max=1024):
    """Batch-tile size: multiple of 8, divides batch when possible (no ragged last
    tile), and >=2 grid steps for larger batches so v7x megacore shards the grid."""
    if batch <= 8:
        return batch                                  # single full block
    divisors = [t for t in range(8, min(batch, tb_max) + 1, 8) if batch % t == 0]
    if not divisors:
        return min(tb_max, batch)                     # ragged last tile (Pallas masks)
    tb = divisors[-1]
    if tb == batch:                                   # would be a 1-step grid
        half = batch // 2
        if half % 8 == 0 and half <= tb_max:
            tb = half                                 # 2 steps -> both TCs busy on v7x
    return tb


# ------------------------------ kernel body ---------------------------------

def _branchnet_kernel(x_ref, w1_ref, b1_ref, w2_ref, b2_ref, w3_ref, b3_ref,
                      wb_ref, bb_ref, out_ref, *, n_b, n_pad):
    """Fused forward for one batch tile: SimpleMLP (Linear+ReLU x2, Linear) followed
    by BranchLayer (one fused matmul over all branches + 128-lane segment max)."""
    cd = w1_ref.dtype
    # x streams from HBM as f32 (native) and is cast to bf16 in VMEM (VPU, cheap).
    x = x_ref[...].astype(cd)

    # ---- SimpleMLP hot path: MXU matmuls (f32 accumulate) + VPU bias/ReLU ----
    h = jnp.dot(x, w1_ref[...], preferred_element_type=jnp.float32) + b1_ref[...]
    h = jnp.maximum(h, 0.0).astype(cd)
    h = jnp.dot(h, w2_ref[...], preferred_element_type=jnp.float32) + b2_ref[...]
    h = jnp.maximum(h, 0.0).astype(cd)
    y = jnp.dot(h, w3_ref[...], preferred_element_type=jnp.float32) + b3_ref[...]
    y = y.astype(cd)

    # ---- BranchLayer: single fused MXU pass covering all n_b branches.
    # z is (TB, n_b * n_pad); branch j lives in lanes [j*n_pad, (j+1)*n_pad).
    # Per-branch bias is added before the max (matches per-branch Linear + max).
    z = jnp.dot(y, wb_ref[...], preferred_element_type=jnp.float32) + bb_ref[...]
    acc = z[:, :n_pad]
    for j in range(1, n_b):                       # 128-aligned lane slices: free-ish
        acc = jnp.maximum(acc, z[:, j * n_pad:(j + 1) * n_pad])

    out_ref[...] = acc.astype(out_ref.dtype)      # bf16 store, full 128-lane vst


# ----------------------------- one-time packing ------------------------------

def prepare_branch_second_net_params(params, compute_dtype=jnp.bfloat16):
    """Hoisted, one-time weight packing: pad to lane multiples of 128, fuse the n_b
    branch linears into a single (d_pad, n_b*128) matrix, cast matmul operands to
    bf16 (biases stay f32).  Zero padding is numerically identical."""
    w1, b1, w2, b2, w3, b3, wb, bb = params
    n_b, _, n_next = wb.shape
    n_pad = n_next + ((-n_next) % _LANE)

    w1p = _pad_axis(w1, 1, _LANE).astype(compute_dtype)                        # (784, 128)
    b1p = _pad_axis(b1, 1, _LANE).astype(jnp.float32)                          # (1, 128)
    w2p = _pad_axis(_pad_axis(w2, 0, _LANE), 1, _LANE).astype(compute_dtype)   # (128, 128)
    b2p = _pad_axis(b2, 1, _LANE).astype(jnp.float32)
    w3p = _pad_axis(_pad_axis(w3, 0, _LANE), 1, _LANE).astype(compute_dtype)   # (128, 128)
    b3p = _pad_axis(b3, 1, _LANE).astype(jnp.float32)

    wbp = _pad_axis(_pad_axis(wb, 1, _LANE), 2, _LANE)                         # (n_b, 128, 128)
    wbp = jnp.transpose(wbp, (1, 0, 2)).reshape(wbp.shape[1], n_b * n_pad)     # (128, n_b*128)
    wbp = wbp.astype(compute_dtype)
    bbp = _pad_axis(bb, 2, _LANE).reshape(1, n_b * n_pad).astype(jnp.float32)

    packed = (w1p, b1p, w2p, b2p, w3p, b3p, wbp, bbp)
    meta = dict(n_b=int(n_b), n_next=int(n_next), n_pad=int(n_pad))
    return packed, meta


# -------------------------------- forward -----------------------------------

def branch_second_net_forward(x, w1p, b1p, w2p, b2p, w3p, b3p, wbp, bbp,
                              *, n_b, n_next, n_pad, tb_max=1024):
    """Single pallas_call, gridded over the batch; weights stay VMEM-resident."""
    B, in_features = x.shape
    tb = _choose_tb(B, tb_max)
    grid = (pl.cdiv(B, tb),)

    def resident(a):  # constant index_map -> block stays resident across grid steps
        return pl.BlockSpec(a.shape, lambda i, _nd=a.ndim: (0,) * _nd)

    kernel = functools.partial(_branchnet_kernel, n_b=n_b, n_pad=n_pad)

    flops = 2 * B * (in_features * w1p.shape[1]
                     + w2p.shape[0] * w2p.shape[1]
                     + w3p.shape[0] * w3p.shape[1]
                     + wbp.shape[0] * wbp.shape[1])
    bytes_accessed = int(x.size) * x.dtype.itemsize
    bytes_accessed += sum(int(a.size) * a.dtype.itemsize
                          for a in (w1p, b1p, w2p, b2p, w3p, b3p, wbp, bbp))
    bytes_accessed += B * n_pad * 2  # bf16 output

    out = pl.pallas_call(
        kernel,
        out_shape=jax.ShapeDtypeStruct((B, n_pad), w1p.dtype),   # bf16 output
        grid=grid,
        in_specs=[pl.BlockSpec((tb, in_features), lambda i: (i, 0)),
                  resident(w1p), resident(b1p),
                  resident(w2p), resident(b2p),
                  resident(w3p), resident(b3p),
                  resident(wbp), resident(bbp)],
        out_specs=pl.BlockSpec((tb, n_pad), lambda i: (i, 0)),
        compiler_params=pltpu.CompilerParams(dimension_semantics=("parallel",)),
        cost_estimate=pl.CostEstimate(flops=flops, transcendentals=0,
                                      bytes_accessed=bytes_accessed),
    )(x, w1p, b1p, w2p, b2p, w3p, b3p, wbp, bbp)

    return out[:, :n_next]


# ----------------------------- parameter setup ------------------------------

def _linear_init(key, fan_in, fan_out):
    """PyTorch nn.Linear default init: U(-1/sqrt(fan_in), 1/sqrt(fan_in))."""
    kw, kb = jax.random.split(key)
    bound = 1.0 / jnp.sqrt(jnp.float32(fan_in))
    w = jax.random.uniform(kw, (fan_in, fan_out), jnp.float32, -bound, bound)
    b = jax.random.uniform(kb, (1, fan_out), jnp.float32, -bound, bound)
    return w, b


def make_params(key, in_features, hidden_layers, output_size, n_b, n_next):
    k1, k2, k3, kb = jax.random.split(key, 4)
    h0, h1 = hidden_layers
    w1, b1 = _linear_init(k1, in_features, h0)
    w2, b2 = _linear_init(k2, h0, h1)
    w3, b3 = _linear_init(k3, h1, output_size)

    kbw, kbb = jax.random.split(kb)
    bound = 1.0 / jnp.sqrt(jnp.float32(output_size))
    wb = jax.random.uniform(kbw, (n_b, output_size, n_next), jnp.float32, -bound, bound)
    bb = jax.random.uniform(kbb, (n_b, 1, n_next), jnp.float32, -bound, bound)
    return (w1, b1, w2, b2, w3, b3, wb, bb)


def _reference_forward(x, params, compute_dtype):
    """Pure-JAX reference using the same dtype casts / f32 accumulation."""
    w1, b1, w2, b2, w3, b3, wb, bb = params
    cd = compute_dtype

    def lin(a, w, b):
        return jnp.dot(a.astype(cd), w.astype(cd),
                       preferred_element_type=jnp.float32) + b

    h = jnp.maximum(lin(x, w1, b1), 0.0)
    h = jnp.maximum(lin(h, w2, b2), 0.0)
    y = lin(h, w3, b3)
    z = jnp.einsum('bi,jin->bjn', y.astype(cd), wb.astype(cd),
                   preferred_element_type=jnp.float32) + bb[:, 0, :][None]
    return jnp.max(z, axis=1)                                   # (B, n_next)


if __name__ == "__main__":
    IN_FEATURES = 784          # SimpleMLP(784, ...)
    HIDDEN_LAYERS = [32, 32]
    OUTPUT_SIZE = 32           # MLP output == BranchLayer n_in
    N_BRANCHES = 4
    N_NEXT = 10

    key = jax.random.PRNGKey(0)
    kx, kp, kx2 = jax.random.split(key, 3)
    params = make_params(kp, IN_FEATURES, HIDDEN_LAYERS, OUTPUT_SIZE,
                         N_BRANCHES, N_NEXT)

    # One-time packing; per-step graph is just the pallas_call (+ tiny lane slice).
    packed, meta = prepare_branch_second_net_params(params)
    fwd = jax.jit(functools.partial(branch_second_net_forward, **meta))

    # Small batch: single full block.
    x = jax.random.normal(kx, (8, IN_FEATURES), jnp.float32)
    out = jax.block_until_ready(fwd(x, *packed))
    ref = jax.block_until_ready(_reference_forward(x, params, jnp.bfloat16))
    assert out.shape == (8, N_NEXT), out.shape
    assert jnp.allclose(out.astype(jnp.float32), ref, atol=3e-2, rtol=3e-2), \
        float(jnp.max(jnp.abs(out.astype(jnp.float32) - ref)))

    # Larger batch: exercises the 2-step grid (tile reuse of resident weights,
    # megacore-shardable on v7x) with no ragged last tile.
    x2 = jax.random.normal(kx2, (32, IN_FEATURES), jnp.float32)
    out2 = jax.block_until_ready(fwd(x2, *packed))
    ref2 = jax.block_until_ready(_reference_forward(x2, params, jnp.bfloat16))
    assert out2.shape == (32, N_NEXT), out2.shape
    assert jnp.allclose(out2.astype(jnp.float32), ref2, atol=3e-2, rtol=3e-2), \
        float(jnp.max(jnp.abs(out2.astype(jnp.float32) - ref2)))

    print("KERNEL_OK")
</pallas_src>

<mosaic_0001>
module attributes {stable_mosaic.version = 11 : i64} {
  func.func @_branchnet_kernel(%arg0: i32, %arg1: memref<8x784xf32, #tpu.memory_space<vmem>>, %arg2: memref<784x128xbf16, #tpu.memory_space<vmem>>, %arg3: memref<1x128xf32, #tpu.memory_space<vmem>>, %arg4: memref<128x128xbf16, #tpu.memory_space<vmem>>, %arg5: memref<1x128xf32, #tpu.memory_space<vmem>>, %arg6: memref<128x128xbf16, #tpu.memory_space<vmem>>, %arg7: memref<1x128xf32, #tpu.memory_space<vmem>>, %arg8: memref<128x512xbf16, #tpu.memory_space<vmem>>, %arg9: memref<1x512xf32, #tpu.memory_space<vmem>>, %arg10: memref<8x128xbf16, #tpu.memory_space<vmem>>) attributes {dimension_semantics = [#tpu.dimension_semantics<parallel>], iteration_bounds = array<i64: 1>, scalar_prefetch = 0 : i64, scratch_operands = 0 : i64, tpu.core_type = #tpu.core_type<tc>, window_params = [{transform_indices = @transform_0, window_bounds = array<i64: 8, 784>}, {pipeline_mode = #tpu.pipeline_mode<synchronous>, transform_indices = @transform_1, window_bounds = array<i64: 784, 128>}, {pipeline_mode = #tpu.pipeline_mode<synchronous>, transform_indices = @transform_2, window_bounds = array<i64: 1, 128>}, {pipeline_mode = #tpu.pipeline_mode<synchronous>, transform_indices = @transform_3, window_bounds = array<i64: 128, 128>}, {pipeline_mode = #tpu.pipeline_mode<synchronous>, transform_indices = @transform_4, window_bounds = array<i64: 1, 128>}, {pipeline_mode = #tpu.pipeline_mode<synchronous>, transform_indices = @transform_5, window_bounds = array<i64: 128, 128>}, {pipeline_mode = #tpu.pipeline_mode<synchronous>, transform_indices = @transform_6, window_bounds = array<i64: 1, 128>}, {pipeline_mode = #tpu.pipeline_mode<synchronous>, transform_indices = @transform_7, window_bounds = array<i64: 128, 512>}, {pipeline_mode = #tpu.pipeline_mode<synchronous>, transform_indices = @transform_8, window_bounds = array<i64: 1, 512>}, {transform_indices = @transform_9, window_bounds = array<i64: 8, 128>}]} {
    %c0 = arith.constant 0 : index
    %c0_0 = arith.constant 0 : index
    %0 = vector.load %arg1[%c0, %c0_0] : memref<8x784xf32, #tpu.memory_space<vmem>>, vector<8x784xf32>
    %1 = arith.truncf %0 : vector<8x784xf32> to vector<8x784xbf16>
    %c0_1 = arith.constant 0 : index
    %c0_2 = arith.constant 0 : index
    %2 = vector.load %arg2[%c0_1, %c0_2] : memref<784x128xbf16, #tpu.memory_space<vmem>>, vector<784x128xbf16>
    %cst = arith.constant dense<0.000000e+00> : vector<8x128xf32>
    %3 = tpu.matmul %1, %2, %cst {dimension_numbers = #tpu.dot_dimension_numbers<[1], [0], [0], [1], [0, 0, 1, 1], [], []>} : vector<8x784xbf16>, vector<784x128xbf16>, vector<8x128xf32> -> vector<8x128xf32>
    %c0_3 = arith.constant 0 : index
    %c0_4 = arith.constant 0 : index
    %4 = vector.load %arg3[%c0_3, %c0_4] : memref<1x128xf32, #tpu.memory_space<vmem>>, vector<1x128xf32>
    %5 = vector.broadcast %4 : vector<1x128xf32> to vector<8x128xf32>
    %6 = arith.addf %3, %5 : vector<8x128xf32>
    %cst_5 = arith.constant 0.000000e+00 : f32
    %7 = vector.broadcast %cst_5 : f32 to vector<8x128xf32>
    %8 = arith.maximumf %6, %7 : vector<8x128xf32>
    %9 = arith.truncf %8 : vector<8x128xf32> to vector<8x128xbf16>
    %c0_6 = arith.constant 0 : index
    %c0_7 = arith.constant 0 : index
    %10 = vector.load %arg4[%c0_6, %c0_7] : memref<128x128xbf16, #tpu.memory_space<vmem>>, vector<128x128xbf16>
    %cst_8 = arith.constant dense<0.000000e+00> : vector<8x128xf32>
    %11 = tpu.matmul %9, %10, %cst_8 {dimension_numbers = #tpu.dot_dimension_numbers<[1], [0], [0], [1], [0, 0, 1, 1], [], []>} : vector<8x128xbf16>, vector<128x128xbf16>, vector<8x128xf32> -> vector<8x128xf32>
    %c0_9 = arith.constant 0 : index
    %c0_10 = arith.constant 0 : index
    %12 = vector.load %arg5[%c0_9, %c0_10] : memref<1x128xf32, #tpu.memory_space<vmem>>, vector<1x128xf32>
    %13 = vector.broadcast %12 : vector<1x128xf32> to vector<8x128xf32>
    %14 = arith.addf %11, %13 : vector<8x128xf32>
    %cst_11 = arith.constant 0.000000e+00 : f32
    %15 = vector.broadcast %cst_11 : f32 to vector<8x128xf32>
    %16 = arith.maximumf %14, %15 : vector<8x128xf32>
    %17 = arith.truncf %16 : vector<8x128xf32> to vector<8x128xbf16>
    %c0_12 = arith.constant 0 : index
    %c0_13 = arith.constant 0 : index
    %18 = vector.load %arg6[%c0_12, %c0_13] : memref<128x128xbf16, #tpu.memory_space<vmem>>, vector<128x128xbf16>
    %cst_14 = arith.constant dense<0.000000e+00> : vector<8x128xf32>
    %19 = tpu.matmul %17, %18, %cst_14 {dimension_numbers = #tpu.dot_dimension_numbers<[1], [0], [0], [1], [0, 0, 1, 1], [], []>} : vector<8x128xbf16>, vector<128x128xbf16>, vector<8x128xf32> -> vector<8x128xf32>
    %c0_15 = arith.constant 0 : index
    %c0_16 = arith.constant 0 : index
    %20 = vector.load %arg7[%c0_15, %c0_16] : memref<1x128xf32, #tpu.memory_space<vmem>>, vector<1x128xf32>
    %21 = vector.broadcast %20 : vector<1x128xf32> to vector<8x128xf32>
    %22 = arith.addf %19, %21 : vector<8x128xf32>
    %23 = arith.truncf %22 : vector<8x128xf32> to vector<8x128xbf16>
    %c0_17 = arith.constant 0 : index
    %c0_18 = arith.constant 0 : index
    %24 = vector.load %arg8[%c0_17, %c0_18] : memref<128x512xbf16, #tpu.memory_space<vmem>>, vector<128x512xbf16>
    %cst_19 = arith.constant dense<0.000000e+00> : vector<8x512xf32>
    %25 = tpu.matmul %23, %24, %cst_19 {dimension_numbers = #tpu.dot_dimension_numbers<[1], [0], [0], [1], [0, 0, 1, 1], [], []>} : vector<8x128xbf16>, vector<128x512xbf16>, vector<8x512xf32> -> vector<8x512xf32>
    %c0_20 = arith.constant 0 : index
    %c0_21 = arith.constant 0 : index
    %26 = vector.load %arg9[%c0_20, %c0_21] : memref<1x512xf32, #tpu.memory_space<vmem>>, vector<1x512xf32>
    %27 = vector.broadcast %26 : vector<1x512xf32> to vector<8x512xf32>
    %28 = arith.addf %25, %27 : vector<8x512xf32>
    %29 = vector.extract_strided_slice %28 {offsets = [0, 0], sizes = [8, 128], strides = [1, 1]} : vector<8x512xf32> to vector<8x128xf32>
    %30 = vector.extract_strided_slice %28 {offsets = [0, 128], sizes = [8, 128], strides = [1, 1]} : vector<8x512xf32> to vector<8x128xf32>
    %31 = arith.maximumf %29, %30 : vector<8x128xf32>
    %32 = vector.extract_strided_slice %28 {offsets = [0, 256], sizes = [8, 128], strides = [1, 1]} : vector<8x512xf32> to vector<8x128xf32>
    %33 = arith.maximumf %31, %32 : vector<8x128xf32>
    %34 = vector.extract_strided_slice %28 {offsets = [0, 384], sizes = [8, 128], strides = [1, 1]} : vector<8x512xf32> to vector<8x128xf32>
    %35 = arith.maximumf %33, %34 : vector<8x128xf32>
    %36 = arith.truncf %35 : vector<8x128xf32> to vector<8x128xbf16>
    %c0_22 = arith.constant 0 : index
    %c0_23 = arith.constant 0 : index
    %37 = vector.load %arg10[%c0_22, %c0_23] : memref<8x128xbf16, #tpu.memory_space<vmem>>, vector<8x128xbf16>
    tpu.vector_store %arg10[%c0_22, %c0_23], %36 {strides = array<i32>} : memref<8x128xbf16, #tpu.memory_space<vmem>>, vector<8x128xbf16>,
    return
  }
  func.func @transform_0(%arg0: i32) -> (i32, i32) {
    %c0_i32 = arith.constant 0 : i32
    %c0_i32_0 = arith.constant 0 : i32
    return %arg0, %c0_i32 : i32, i32
  }
  func.func @transform_1(%arg0: i32) -> (i32, i32) {
    %c0_i32 = arith.constant 0 : i32
    %c0_i32_0 = arith.constant 0 : i32
    %c0_i32_1 = arith.constant 0 : i32
    return %c0_i32, %c0_i32_0 : i32, i32
  }
  func.func @transform_2(%arg0: i32) -> (i32, i32) {
    %c0_i32 = arith.constant 0 : i32
    %c0_i32_0 = arith.constant 0 : i32
    %c0_i32_1 = arith.constant 0 : i32
    return %c0_i32, %c0_i32_0 : i32, i32
  }
  func.func @transform_3(%arg0: i32) -> (i32, i32) {
    %c0_i32 = arith.constant 0 : i32
    %c0_i32_0 = arith.constant 0 : i32
    %c0_i32_1 = arith.constant 0 : i32
    return %c0_i32, %c0_i32_0 : i32, i32
  }
  func.func @transform_4(%arg0: i32) -> (i32, i32) {
    %c0_i32 = arith.constant 0 : i32
    %c0_i32_0 = arith.constant 0 : i32
    %c0_i32_1 = arith.constant 0 : i32
    return %c0_i32, %c0_i32_0 : i32, i32
  }
  func.func @transform_5(%arg0: i32) -> (i32, i32) {
    %c0_i32 = arith.constant 0 : i32
    %c0_i32_0 = arith.constant 0 : i32
    %c0_i32_1 = arith.constant 0 : i32
    return %c0_i32, %c0_i32_0 : i32, i32
  }
  func.func @transform_6(%arg0: i32) -> (i32, i32) {
    %c0_i32 = arith.constant 0 : i32
    %c0_i32_0 = arith.constant 0 : i32
    %c0_i32_1 = arith.constant 0 : i32
    return %c0_i32, %c0_i32_0 : i32, i32
  }
  func.func @transform_7(%arg0: i32) -> (i32, i32) {
    %c0_i32 = arith.constant 0 : i32
    %c0_i32_0 = arith.constant 0 : i32
    %c0_i32_1 = arith.constant 0 : i32
    return %c0_i32, %c0_i32_0 : i32, i32
  }
  func.func @transform_8(%arg0: i32) -> (i32, i32) {
    %c0_i32 = arith.constant 0 : i32
    %c0_i32_0 = arith.constant 0 : i32
    %c0_i32_1 = arith.constant 0 : i32
    return %c0_i32, %c0_i32_0 : i32, i32
  }
  func.func @transform_9(%arg0: i32) -> (i32, i32) {
    %c0_i32 = arith.constant 0 : i32
    %c0_i32_0 = arith.constant 0 : i32
    return %arg0, %c0_i32 : i32, i32
  }
}

</mosaic_0001>

<llo_original>
// kernel: branch_second_net_forward.1
$region0: #{branch_second_net_forward.1}
  #allocation0 [shape = 'u32[]', space=smem, size = 0x4, offset = 0x4, fixed_abs, tag = 'smem constant byte address 0x4 - core index']
  #allocation1 [shape = 'u32[72,128]{1,0:T(1,128)}', space=vmem, size = 0x9000, scoped, tag = 'internal scratch']
  %s0 = inlined_call_operand.hbm [shape: f32[8,784], index: 0, kind: input, shape index: {}]
  %s1 = inlined_call_operand.hbm [shape: bf16[784,128], index: 1, kind: input, shape index: {}]
  %s2 = inlined_call_operand.vmem [shape: f32[1,128], index: 2, kind: input, shape index: {}]
  %s3 = inlined_call_operand.hbm [shape: bf16[128,128], index: 3, kind: input, shape index: {}]
  %s4 = inlined_call_operand.vmem [shape: f32[1,128], index: 4, kind: input, shape index: {}]
  %s5 = inlined_call_operand.hbm [shape: bf16[128,128], index: 5, kind: input, shape index: {}]
  %s6 = inlined_call_operand.vmem [shape: f32[1,128], index: 6, kind: input, shape index: {}]
  %s7 = inlined_call_operand.hbm [shape: bf16[128,512], index: 7, kind: input, shape index: {}]
  %s8 = inlined_call_operand.vmem [shape: f32[1,512], index: 8, kind: input, shape index: {}]
  %s9 = inlined_call_operand.hbm [shape: bf16[8,128], index: 9, kind: output, shape index: {}]
  %s10 = sld [smem:[#allocation0]]
  $region66: #{branch_second_net_forward.1} parent=0
    _
  %s12 = ssub.s32 1, %s10
  %s13 = scalar_select 0, %s12, %s10
  $region1: #{branch_second_net_forward.1} parent=0
    #allocation2 [shape = 'u8[28672]{0}', space=vmem, size = 0x7000, scoped, tag = 'input window, operand 0, single buffered']
    #allocation3 [shape = 's32[1]{0}', space=sflag, size = 0x4, scoped, tag = 'scoped memory for branch_second_net_forward.1']
    #allocation4 [shape = 's32[1]{0}', space=sflag, size = 0x4, scoped, tag = 'scoped memory for branch_second_net_forward.1']
    #allocation5 [shape = 'u8[200704]{0}', space=vmem, size = 0x31000, scoped, tag = 'input window, operand 1, single buffered']
    #allocation6 [shape = 's32[1]{0}', space=sflag, size = 0x4, scoped, tag = 'scoped memory for branch_second_net_forward.1']
    #allocation7 [shape = 'u8[32768]{0}', space=vmem, size = 0x8000, scoped, tag = 'input window, operand 3, single buffered']
    #allocation8 [shape = 'u8[32768]{0}', space=vmem, size = 0x8000, scoped, tag = 'input window, operand 5, single buffered']
    #allocation9 [shape = 's32[1]{0}', space=sflag, size = 0x4, scoped, tag = 'scoped memory for branch_second_net_forward.1']
    #allocation10 [shape = 'u8[131072]{0}', space=vmem, size = 0x20000, scoped, tag = 'input window, operand 7, single buffered']
    #allocation11 [shape = 'u8[2048]{0}', space=vmem, size = 0x800, scoped, tag = 'output window, operand 0, single buffered']
    %14 = vsyncpa [#allocation3], 0
    %15 = vsyncpa [#allocation6], 0
    %16 = vsyncpa [#allocation9], 0
    %17 = vsyncpa [#allocation4], 0
    // Predicated region
    $region2: #{branch_second_net_forward.1} parent=1 // pred_check
      _
    $region3: #{branch_second_net_forward.1} parent=1 // pred_check_branch
      %19 = sbr.rel (0) target = $region5
    $region4: #{branch_second_net_forward.1} parent=1 // pred_region
      %21 = vsyncadd [#allocation3], 0
      %s23 = sshll.u32 %s0, 4
      %s24 = int_to_ptr.hbm [resolvable:$true] %s23
      %s25 = sshll.u32 [#allocation2], 4
      %s26 = int_to_ptr.vmem [resolvable:$true] %s25
      %28 = dma.hbm_to_vmem [thread:$0]  %s24, 896, %s26, [#allocation3]
    $region5: #{branch_second_net_forward.1} parent=1 // pred_fallthru
      _
    // Predicated region
    $region6: #{branch_second_net_forward.1} parent=1 // pred_check
      _
    $region7: #{branch_second_net_forward.1} parent=1 // pred_check_branch
      %30 = sbr.rel (0) target = $region9
    $region8: #{branch_second_net_forward.1} parent=1 // pred_region
      %32 = vsyncadd [#allocation6], 0
      %s33 = sshll.u32 %s1, 4
      %s34 = int_to_ptr.hbm [resolvable:$true] %s33
      %s35 = sshll.u32 [#allocation5], 4
      %s36 = int_to_ptr.vmem [resolvable:$true] %s35
      %41 = dma.hbm_to_vmem [thread:$0]  %s34, 6272, %s36, [#allocation6], 64, 64, 4
    $region9: #{branch_second_net_forward.1} parent=1 // pred_fallthru
      _
    // Predicated region
    $region10: #{branch_second_net_forward.1} parent=1 // pred_check
      _
    $region11: #{branch_second_net_forward.1} parent=1 // pred_check_branch
      %43 = sbr.rel (0) target = $region13
    $region12: #{branch_second_net_forward.1} parent=1 // pred_region
      _
    $region13: #{branch_second_net_forward.1} parent=1 // pred_fallthru
      _
    // Predicated region
    $region14: #{branch_second_net_forward.1} parent=1 // pred_check
      _
    $region15: #{branch_second_net_forward.1} parent=1 // pred_check_branch
      %45 = sbr.rel (0) target = $region17
    $region16: #{branch_second_net_forward.1} parent=1 // pred_region
      %47 = vsyncadd [#allocation6], 0
      %s48 = sshll.u32 %s3, 4
      %s49 = int_to_ptr.hbm [resolvable:$true] %s48
      %s50 = sshll.u32 [#allocation7], 4
      %s51 = int_to_ptr.vmem [resolvable:$true] %s50
      %56 = dma.hbm_to_vmem [thread:$0]  %s49, 1024, %s51, [#allocation6], 64, 64, 4
    $region17: #{branch_second_net_forward.1} parent=1 // pred_fallthru
      _
    // Predicated region
    $region18: #{branch_second_net_forward.1} parent=1 // pred_check
      _
    $region19: #{branch_second_net_forward.1} parent=1 // pred_check_branch
      %58 = sbr.rel (0) target = $region21
    $region20: #{branch_second_net_forward.1} parent=1 // pred_region
      _
    $region21: #{branch_second_net_forward.1} parent=1 // pred_fallthru
      _
    // Predicated region
    $region22: #{branch_second_net_forward.1} parent=1 // pred_check
      _
    $region23: #{branch_second_net_forward.1} parent=1 // pred_check_branch
      %60 = sbr.rel (0) target = $region25
    $region24: #{branch_second_net_forward.1} parent=1 // pred_region
      %62 = vsyncadd [#allocation9], 0
      %s63 = sshll.u32 %s5, 4
      %s64 = int_to_ptr.hbm [resolvable:$true] %s63
      %s65 = sshll.u32 [#allocation8], 4
      %s66 = int_to_ptr.vmem [resolvable:$true] %s65
      %71 = dma.hbm_to_vmem [thread:$0]  %s64, 1024, %s66, [#allocation9], 64, 64, 4
    $region25: #{branch_second_net_forward.1} parent=1 // pred_fallthru
      _
    // Predicated region
    $region26: #{branch_second_net_forward.1} parent=1 // pred_check
      _
    $region27: #{branch_second_net_forward.1} parent=1 // pred_check_branch
      %73 = sbr.rel (0) target = $region29
    $region28: #{branch_second_net_forward.1} parent=1 // pred_region
      _
    $region29: #{branch_second_net_forward.1} parent=1 // pred_fallthru
      _
    // Predicated region
    $region30: #{branch_second_net_forward.1} parent=1 // pred_check
      _
    $region31: #{branch_second_net_forward.1} parent=1 // pred_check_branch
      %75 = sbr.rel (0) target = $region33
    $region32: #{branch_second_net_forward.1} parent=1 // pred_region
      %77 = vsyncadd [#allocation9], 0
      %s78 = sshll.u32 %s7, 4
      %s79 = int_to_ptr.hbm [resolvable:$true] %s78
      %s80 = sshll.u32 [#allocation10], 4
      %s81 = int_to_ptr.vmem [resolvable:$true] %s80
      %86 = dma.hbm_to_vmem [thread:$0]  %s79, 4096, %s81, [#allocation9], 256, 256, 16
    $region33: #{branch_second_net_forward.1} parent=1 // pred_fallthru
      _
    // Predicated region
    $region34: #{branch_second_net_forward.1} parent=1 // pred_check
      _
    $region35: #{branch_second_net_forward.1} parent=1 // pred_check_branch
      %88 = sbr.rel (0) target = $region37
    $region36: #{branch_second_net_forward.1} parent=1 // pred_region
      _
    $region37: #{branch_second_net_forward.1} parent=1 // pred_fallthru
      _
    // Predicated region
    $region38: #{branch_second_net_forward.1} parent=1 // pred_check
      _
    $region39: #{branch_second_net_forward.1} parent=1 // pred_check_branch
      %90 = sbr.rel (0) target = $region41
    $region40: #{branch_second_net_forward.1} parent=1 // pred_region
      %92 = dma.done [#allocation3], 896
    $region41: #{branch_second_net_forward.1} parent=1 // pred_fallthru
      _
    // Predicated region
    $region42: #{branch_second_net_forward.1} parent=1 // pred_check
      _
    $region43: #{branch_second_net_forward.1} parent=1 // pred_check_branch
      %94 = sbr.rel (0) target = $region45
    $region44: #{branch_second_net_forward.1} parent=1 // pred_region
      %96 = dma.done [#allocation6], 6272
    $region45: #{branch_second_net_forward.1} parent=1 // pred_fallthru
      _
    // Predicated region
    $region46: #{branch_second_net_forward.1} parent=1 // pred_check
      _
    $region47: #{branch_second_net_forward.1} parent=1 // pred_check_branch
      %98 = sbr.rel (0) target = $region49
    $region48: #{branch_second_net_forward.1} parent=1 // pred_region
      %100 = dma.done [#allocation6], 1024
    $region49: #{branch_second_net_forward.1} parent=1 // pred_fallthru
      _
    // Predicated region
    $region50: #{branch_second_net_forward.1} parent=1 // pred_check
      _
    $region51: #{branch_second_net_forward.1} parent=1 // pred_check_branch
      %102 = sbr.rel (0) target = $region53
    $region52: #{branch_second_net_forward.1} parent=1 // pred_region
      %104 = dma.done [#allocation9], 1024
    $region53: #{branch_second_net_forward.1} parent=1 // pred_fallthru
      _
    // Predicated region
    $region54: #{branch_second_net_forward.1} parent=1 // pred_check
      _
    $region55: #{branch_second_net_forward.1} parent=1 // pred_check_branch
      %106 = sbr.rel (0) target = $region57
    $region56: #{branch_second_net_forward.1} parent=1 // pred_region
      %108 = dma.done [#allocation9], 4096
    $region57: #{branch_second_net_forward.1} parent=1 // pred_fallthru
      _
    %v110 = vld [vmem:[#allocation2] sm:$0xff]
    %v111 = vld [vmem:[#allocation2 + $0x8] sm:$0xff]
    %v112 = vld [vmem:[#allocation2 + $0x10] sm:$0xff]
    %v113 = vld [vmem:[#allocation2 + $0x18] sm:$0xff]
    %v114 = vld [vmem:[#allocation2 + $0x20] sm:$0xff]
    %v115 = vld [vmem:[#allocation2 + $0x28] sm:$0xff]
    %v116 = vld [vmem:[#allocation2 + $0x30] sm:$0xff]
    %v117 = vpack.c.bf16 %v110, %v110
    %v118 = vpack.c.bf16 %v111, %v111
    %v119 = vpack.c.bf16 %v112, %v112
    %v120 = vpack.c.bf16 %v113, %v113
    %v121 = vpack.c.bf16 %v114, %v114
    %v122 = vpack.c.bf16 %v115, %v115
    %v123 = vpack.c.bf16 %v116, %v116
    %v124 = vld [vmem:[#allocation5] sm:$0xf]
    %v125 = vld [vmem:[#allocation5 + $0x4] sm:$0xf]
    %v126 = vld [vmem:[#allocation5 + $0x8] sm:$0xf]
    %v127 = vld [vmem:[#allocation5 + $0xc] sm:$0xf]
    %v128 = vld [vmem:[#allocation5 + $0x10] sm:$0xf]
    %v129 = vld [vmem:[#allocation5 + $0x14] sm:$0xf]
    %v130 = vld [vmem:[#allocation5 + $0x18] sm:$0xf]
    %v131 = vld [vmem:[#allocation5 + $0x1c] sm:$0xf]
    %v132 = vld [vmem:[#allocation5 + $0x20] sm:$0xf]
    %v133 = vld [vmem:[#allocation5 + $0x24] sm:$0xf]
    %v134 = vld [vmem:[#allocation5 + $0x28] sm:$0xf]
    %v135 = vld [vmem:[#allocation5 + $0x2c] sm:$0xf]
    %v136 = vld [vmem:[#allocation5 + $0x30] sm:$0xf]
    %v137 = vld [vmem:[#allocation5 + $0x34] sm:$0xf]
    %v138 = vld [vmem:[#allocation5 + $0x38] sm:$0xf]
    %v139 = vld [vmem:[#allocation5 + $0x3c] sm:$0xf]
    %v140 = vld [vmem:[#allocation5 + $0x40] sm:$0xf]
    %v141 = vld [vmem:[#allocation5 + $0x44] sm:$0xf]
    %v142 = vld [vmem:[#allocation5 + $0x48] sm:$0xf]
    %v143 = vld [vmem:[#allocation5 + $0x4c] sm:$0xf]
    %v144 = vld [vmem:[#allocation5 + $0x50] sm:$0xf]
    %v145 = vld [vmem:[#allocation5 + $0x54] sm:$0xf]
    %v146 = vld [vmem:[#allocation5 + $0x58] sm:$0xf]
    %v147 = vld [vmem:[#allocation5 + $0x5c] sm:$0xf]
    %v148 = vld [vmem:[#allocation5 + $0x60] sm:$0xf]
    %v149 = vld [vmem:[#allocation5 + $0x64] sm:$0xf]
    %v150 = vld [vmem:[#allocation5 + $0x68] sm:$0xf]
    %v151 = vld [vmem:[#allocation5 + $0x6c] sm:$0xf]
    %v152 = vld [vmem:[#allocation5 + $0x70] sm:$0xf]
    %v153 = vld [vmem:[#allocation5 + $0x74] sm:$0xf]
    %v154 = vld [vmem:[#allocation5 + $0x78] sm:$0xf]
    %v155 = vld [vmem:[#allocation5 + $0x7c] sm:$0xf]
    %v156 = vld [vmem:[#allocation5 + $0x80] sm:$0xf]
    %v157 = vld [vmem:[#allocation5 + $0x84] sm:$0xf]
    %v158 = vld [vmem:[#allocation5 + $0x88] sm:$0xf]
    %v159 = vld [vmem:[#allocation5 + $0x8c] sm:$0xf]
    %v160 = vld [vmem:[#allocation5 + $0x90] sm:$0xf]
    %v161 = vld [vmem:[#allocation5 + $0x94] sm:$0xf]
    %v162 = vld [vmem:[#allocation5 + $0x98] sm:$0xf]
    %v163 = vld [vmem:[#allocation5 + $0x9c] sm:$0xf]
    %v164 = vld [vmem:[#allocation5 + $0xa0] sm:$0xf]
    %v165 = vld [vmem:[#allocation5 + $0xa4] sm:$0xf]
    %v166 = vld [vmem:[#allocation5 + $0xa8] sm:$0xf]
    %v167 = vld [vmem:[#allocation5 + $0xac] sm:$0xf]
    %v168 = vld [vmem:[#allocation5 + $0xb0] sm:$0xf]
    %v169 = vld [vmem:[#allocation5 + $0xb4] sm:$0xf]
    %v170 = vld [vmem:[#allocation5 + $0xb8] sm:$0xf]
    %v171 = vld [vmem:[#allocation5 + $0xbc] sm:$0xf]
    %v172 = vld [vmem:[#allocation5 + $0xc0] sm:$0xf]
    %v173 = vld [vmem:[#allocation5 + $0xc4] sm:$0xf]
    %v174 = vld [vmem:[#allocation5 + $0xc8] sm:$0xf]
    %v175 = vld [vmem:[#allocation5 + $0xcc] sm:$0xf]
    %v176 = vld [vmem:[#allocation5 + $0xd0] sm:$0xf]
    %v177 = vld [vmem:[#allocation5 + $0xd4] sm:$0xf]
    %v178 = vld [vmem:[#allocation5 + $0xd8] sm:$0xf]
    %v179 = vld [vmem:[#allocation5 + $0xdc] sm:$0xf]
    %v180 = vld [vmem:[#allocation5 + $0xe0] sm:$0xf]
    %v181 = vld [vmem:[#allocation5 + $0xe4] sm:$0xf]
    %v182 = vld [vmem:[#allocation5 + $0xe8] sm:$0xf]
    %v183 = vld [vmem:[#allocation5 + $0xec] sm:$0xf]
    %v184 = vld [vmem:[#allocation5 + $0xf0] sm:$0xf]
    %v185 = vld [vmem:[#allocation5 + $0xf4] sm:$0xf]
    %v186 = vld [vmem:[#allocation5 + $0xf8] sm:$0xf]
    %v187 = vld [vmem:[#allocation5 + $0xfc] sm:$0xf]
    %v188 = vld [vmem:[#allocation5 + $0x100] sm:$0xf]
    %v189 = vld [vmem:[#allocation5 + $0x104] sm:$0xf]
    %v190 = vld [vmem:[#allocation5 + $0x108] sm:$0xf]
    %v191 = vld [vmem:[#allocation5 + $0x10c] sm:$0xf]
    %v192 = vld [vmem:[#allocation5 + $0x110] sm:$0xf]
    %v193 = vld [vmem:[#allocation5 + $0x114] sm:$0xf]
    %v194 = vld [vmem:[#allocation5 + $0x118] sm:$0xf]
    %v195 = vld [vmem:[#allocation5 + $0x11c] sm:$0xf]
    %v196 = vld [vmem:[#allocation5 + $0x120] sm:$0xf]
    %v197 = vld [vmem:[#allocation5 + $0x124] sm:$0xf]
    %v198 = vld [vmem:[#allocation5 + $0x128] sm:$0xf]
    %v199 = vld [vmem:[#allocation5 + $0x12c] sm:$0xf]
    %v200 = vld [vmem:[#allocation5 + $0x130] sm:$0xf]
    %v201 = vld [vmem:[#allocation5 + $0x134] sm:$0xf]
    %v202 = vld [vmem:[#allocation5 + $0x138] sm:$0xf]
    %v203 = vld [vmem:[#allocation5 + $0x13c] sm:$0xf]
    %v204 = vld [vmem:[#allocation5 + $0x140] sm:$0xf]
    %v205 = vld [vmem:[#allocation5 + $0x144] sm:$0xf]
    %v206 = vld [vmem:[#allocation5 + $0x148] sm:$0xf]
    %v207 = vld [vmem:[#allocation5 + $0x14c] sm:$0xf]
    %v208 = vld [vmem:[#allocation5 + $0x150] sm:$0xf]
    %v209 = vld [vmem:[#allocation5 + $0x154] sm:$0xf]
    %v210 = vld [vmem:[#allocation5 + $0x158] sm:$0xf]
    %v211 = vld [vmem:[#allocation5 + $0x15c] sm:$0xf]
    %v212 = vld [vmem:[#allocation5 + $0x160] sm:$0xf]
    %v213 = vld [vmem:[#allocation5 + $0x164] sm:$0xf]
    %v214 = vld [vmem:[#allocation5 + $0x168] sm:$0xf]
    %v215 = vld [vmem:[#allocation5 + $0x16c] sm:$0xf]
    %v216 = vld [vmem:[#allocation5 + $0x170] sm:$0xf]
    %v217 = vld [vmem:[#allocation5 + $0x174] sm:$0xf]
    %v218 = vld [vmem:[#allocation5 + $0x178] sm:$0xf]
    %v219 = vld [vmem:[#allocation5 + $0x17c] sm:$0xf]
    %v220 = vld [vmem:[#allocation5 + $0x180] sm:$0xf]
    %v221 = vld [vmem:[#allocation5 + $0x184] sm:$0xf]
    %v222 = vld [vmem:[%s2] sm:$0x1]
    %v224 = vperm.slane %v222, 0
    %v324 = vunpack.c.l.b16 %v124
    %v325 = vunpack.c.l.b16 %v125
    %v326 = vunpack.c.l.b16 %v126
    %v327 = vunpack.c.l.b16 %v127
    %v328 = vunpack.c.l.b16 %v128
    %v329 = vunpack.c.l.b16 %v129
    %v330 = vunpack.c.l.b16 %v130
    %v331 = vunpack.c.l.b16 %v131
    %v332 = vunpack.c.l.b16 %v132
    %v333 = vunpack.c.l.b16 %v133
    %v334 = vunpack.c.l.b16 %v134
    %v335 = vunpack.c.l.b16 %v135
    %v336 = vunpack.c.l.b16 %v136
    %v337 = vunpack.c.l.b16 %v137
    %v338 = vunpack.c.l.b16 %v138
    %v339 = vunpack.c.l.b16 %v139
    %v340 = vunpack.c.l.b16 %v140
    %v341 = vunpack.c.l.b16 %v141
    %v342 = vunpack.c.l.b16 %v142
    %v343 = vunpack.c.l.b16 %v143
    %v344 = vunpack.c.l.b16 %v144
    %v345 = vunpack.c.l.b16 %v145
    %v346 = vunpack.c.l.b16 %v146
    %v347 = vunpack.c.l.b16 %v147
    %v348 = vunpack.c.l.b16 %v148
    %v349 = vunpack.c.l.b16 %v149
    %v350 = vunpack.c.l.b16 %v150
    %v351 = vunpack.c.l.b16 %v151
    %v352 = vunpack.c.l.b16 %v152
    %v353 = vunpack.c.l.b16 %v153
    %v354 = vunpack.c.l.b16 %v154
    %v355 = vunpack.c.l.b16 %v155
    %v356 = vunpack.c.l.b16 %v156
    %v357 = vunpack.c.l.b16 %v157
    %v358 = vunpack.c.l.b16 %v158
    %v359 = vunpack.c.l.b16 %v159
    %v360 = vunpack.c.l.b16 %v160
    %v361 = vunpack.c.l.b16 %v161
    %v362 = vunpack.c.l.b16 %v162
    %v363 = vunpack.c.l.b16 %v163
    %v364 = vunpack.c.l.b16 %v164
    %v365 = vunpack.c.l.b16 %v165
    %v366 = vunpack.c.l.b16 %v166
    %v367 = vunpack.c.l.b16 %v167
    %v368 = vunpack.c.l.b16 %v168
    %v369 = vunpack.c.l.b16 %v169
    %v370 = vunpack.c.l.b16 %v170
    %v371 = vunpack.c.l.b16 %v171
    %v372 = vunpack.c.l.b16 %v172
    %v373 = vunpack.c.l.b16 %v173
    %v374 = vunpack.c.l.b16 %v174
    %v375 = vunpack.c.l.b16 %v175
    %v376 = vunpack.c.l.b16 %v176
    %v377 = vunpack.c.l.b16 %v177
    %v378 = vunpack.c.l.b16 %v178
    %v379 = vunpack.c.l.b16 %v179
    %v380 = vunpack.c.l.b16 %v180
    %v381 = vunpack.c.l.b16 %v181
    %v382 = vunpack.c.l.b16 %v182
    %v383 = vunpack.c.l.b16 %v183
    %v384 = vunpack.c.l.b16 %v184
    %v385 = vunpack.c.l.b16 %v185
    %v386 = vunpack.c.l.b16 %v186
    %v387 = vunpack.c.l.b16 %v187
    %v388 = vunpack.c.l.b16 %v188
    %v389 = vunpack.c.l.b16 %v189
    %v390 = vunpack.c.l.b16 %v190
    %v391 = vunpack.c.l.b16 %v191
    %v392 = vunpack.c.l.b16 %v192
    %v393 = vunpack.c.l.b16 %v193
    %v394 = vunpack.c.l.b16 %v194
    %v395 = vunpack.c.l.b16 %v195
    %v396 = vunpack.c.l.b16 %v196
    %v397 = vunpack.c.l.b16 %v197
    %v398 = vunpack.c.l.b16 %v198
    %v399 = vunpack.c.l.b16 %v199
    %v400 = vunpack.c.l.b16 %v200
    %v401 = vunpack.c.l.b16 %v201
    %v402 = vunpack.c.l.b16 %v202
    %v403 = vunpack.c.l.b16 %v203
    %v404 = vunpack.c.l.b16 %v204
    %v405 = vunpack.c.l.b16 %v205
    %v406 = vunpack.c.l.b16 %v206
    %v407 = vunpack.c.l.b16 %v207
    %v408 = vunpack.c.l.b16 %v208
    %v409 = vunpack.c.l.b16 %v209
    %v410 = vunpack.c.l.b16 %v210
    %v411 = vunpack.c.l.b16 %v211
    %v412 = vunpack.c.l.b16 %v212
    %v413 = vunpack.c.l.b16 %v213
    %v414 = vunpack.c.l.b16 %v214
    %v415 = vunpack.c.l.b16 %v215
    %v416 = vunpack.c.l.b16 %v216
    %v417 = vunpack.c.l.b16 %v217
    %v418 = vunpack.c.l.b16 %v218
    %v419 = vunpack.c.l.b16 %v219
    %v420 = vunpack.c.l.b16 %v220
    %v421 = vunpack.c.l.b16 %v221
    %v422 = vpack.c.b16 %v325, %v324
    %v423 = vpack.c.b16 %v327, %v326
    %v424 = vpack.c.b16 %v329, %v328
    %v425 = vpack.c.b16 %v331, %v330
    %v426 = vpack.c.b16 %v333, %v332
    %v427 = vpack.c.b16 %v335, %v334
    %v428 = vpack.c.b16 %v337, %v336
    %v429 = vpack.c.b16 %v339, %v338
    %v430 = vpack.c.b16 %v341, %v340
    %v431 = vpack.c.b16 %v343, %v342
    %v432 = vpack.c.b16 %v345, %v344
    %v433 = vpack.c.b16 %v347, %v346
    %v434 = vpack.c.b16 %v349, %v348
    %v435 = vpack.c.b16 %v351, %v350
    %v436 = vpack.c.b16 %v353, %v352
    %v437 = vpack.c.b16 %v355, %v354
    %v438 = vpack.c.b16 %v357, %v356
    %v439 = vpack.c.b16 %v359, %v358
    %v440 = vpack.c.b16 %v361, %v360
    %v441 = vpack.c.b16 %v363, %v362
    %v442 = vpack.c.b16 %v365, %v364
    %v443 = vpack.c.b16 %v367, %v366
    %v444 = vpack.c.b16 %v369, %v368
    %v445 = vpack.c.b16 %v371, %v370
    %v446 = vpack.c.b16 %v373, %v372
    %v447 = vpack.c.b16 %v375, %v374
    %v448 = vpack.c.b16 %v377, %v376
    %v449 = vpack.c.b16 %v379, %v378
    %v450 = vpack.c.b16 %v381, %v380
    %v451 = vpack.c.b16 %v383, %v382
    %v452 = vpack.c.b16 %v385, %v384
    %v453 = vpack.c.b16 %v387, %v386
    %v454 = vpack.c.b16 %v389, %v388
    %v455 = vpack.c.b16 %v391, %v390
    %v456 = vpack.c.b16 %v393, %v392
    %v457 = vpack.c.b16 %v395, %v394
    %v458 = vpack.c.b16 %v397, %v396
    %v459 = vpack.c.b16 %v399, %v398
    %v460 = vpack.c.b16 %v401, %v400
    %v461 = vpack.c.b16 %v403, %v402
    %v462 = vpack.c.b16 %v405, %v404
    %v463 = vpack.c.b16 %v407, %v406
    %v464 = vpack.c.b16 %v409, %v408
    %v465 = vpack.c.b16 %v411, %v410
    %v466 = vpack.c.b16 %v413, %v412
    %v467 = vpack.c.b16 %v415, %v414
    %v468 = vpack.c.b16 %v417, %v416
    %v469 = vpack.c.b16 %v419, %v418
    %v470 = vpack.c.b16 %v421, %v420
    %vm520 = vcmask 130048
    %v522 = vsel %vm520, %v123, 0
    %524 = vmatpush.bf16.msra.mxu0 %v429
    %525 = vmatpush.bf16.msra.mxu0 %v428
    %526 = vmatpush.bf16.msra.mxu0 %v427
    %527 = vmatpush.bf16.msra.mxu0 %v426
    %528 = vmatpush.bf16.msra.mxu0 %v425
    %529 = vmatpush.bf16.msra.mxu0 %v424
    %530 = vmatpush.bf16.msra.mxu0 %v423
    %531 = vmatpush.bf16.msra.mxu0 %v422
    %532 = vmatmul.bf16.gmra.mxu0 %v117
    %v533 = vpop.f32.mrf.mxu0
    %v534 = vadd.f32 %v224, %v533
    %v535 = vpop.f32.mrf.mxu0
    %536 = vdwg.mxu0
    %537 = vmatpush.bf16.msra.mxu0 %v437
    %538 = vmatpush.bf16.msra.mxu0 %v436
    %539 = vmatpush.bf16.msra.mxu0 %v435
    %540 = vmatpush.bf16.msra.mxu0 %v434
    %541 = vmatpush.bf16.msra.mxu0 %v433
    %542 = vmatpush.bf16.msra.mxu0 %v432
    %543 = vmatpush.bf16.msra.mxu0 %v431
    %544 = vmatpush.bf16.msra.mxu0 %v430
    %545 = vmatmul.bf16.gmra.mxu0 %v118
    %v546 = vpop.f32.mrf.mxu0
    %v547 = vadd.f32 %v534, %v546
    %v548 = vpop.f32.mrf.mxu0
    %549 = vdwg.mxu0
    %550 = vmatpush.bf16.msra.mxu0 %v445
    %551 = vmatpush.bf16.msra.mxu0 %v444
    %552 = vmatpush.bf16.msra.mxu0 %v443
    %553 = vmatpush.bf16.msra.mxu0 %v442
    %554 = vmatpush.bf16.msra.mxu0 %v441
    %555 = vmatpush.bf16.msra.mxu0 %v440
    %556 = vmatpush.bf16.msra.mxu0 %v439
    %557 = vmatpush.bf16.msra.mxu0 %v438
    %558 = vmatmul.bf16.gmra.mxu0 %v119
    %v559 = vpop.f32.mrf.mxu0
    %v560 = vadd.f32 %v547, %v559
    %v561 = vpop.f32.mrf.mxu0
    %562 = vdwg.mxu0
    %563 = vmatpush.bf16.msra.mxu0 %v453
    %564 = vmatpush.bf16.msra.mxu0 %v452
    %565 = vmatpush.bf16.msra.mxu0 %v451
    %566 = vmatpush.bf16.msra.mxu0 %v450
    %567 = vmatpush.bf16.msra.mxu0 %v449
    %568 = vmatpush.bf16.msra.mxu0 %v448
    %569 = vmatpush.bf16.msra.mxu0 %v447
    %570 = vmatpush.bf16.msra.mxu0 %v446
    %571 = vmatmul.bf16.gmra.mxu0 %v120
    %v572 = vpop.f32.mrf.mxu0
    %v573 = vadd.f32 %v560, %v572
    %v574 = vpop.f32.mrf.mxu0
    %575 = vdwg.mxu0
    %576 = vmatpush.bf16.msra.mxu0 %v461
    %577 = vmatpush.bf16.msra.mxu0 %v460
    %578 = vmatpush.bf16.msra.mxu0 %v459
    %579 = vmatpush.bf16.msra.mxu0 %v458
    %580 = vmatpush.bf16.msra.mxu0 %v457
    %581 = vmatpush.bf16.msra.mxu0 %v456
    %582 = vmatpush.bf16.msra.mxu0 %v455
    %583 = vmatpush.bf16.msra.mxu0 %v454
    %584 = vmatmul.bf16.gmra.mxu0 %v121
    %v585 = vpop.f32.mrf.mxu0
    %v586 = vadd.f32 %v573, %v585
    %v587 = vpop.f32.mrf.mxu0
    %588 = vdwg.mxu0
    %589 = vmatpush.bf16.msra.mxu0 %v469
    %590 = vmatpush.bf16.msra.mxu0 %v468
    %591 = vmatpush.bf16.msra.mxu0 %v467
    %592 = vmatpush.bf16.msra.mxu0 %v466
    %593 = vmatpush.bf16.msra.mxu0 %v465
    %594 = vmatpush.bf16.msra.mxu0 %v464
    %595 = vmatpush.bf16.msra.mxu0 %v463
    %596 = vmatpush.bf16.msra.mxu0 %v462
    %597 = vmatmul.bf16.gmra.mxu0 %v122
    %v598 = vpop.f32.mrf.mxu0
    %v599 = vadd.f32 %v586, %v598
    %v600 = vpop.f32.mrf.mxu0
    %601 = vdwg.mxu0
    %602 = vmatpush.bf16.msra.mxu0 0
    %603 = vmatpush.bf16.msra.mxu0 0
    %604 = vmatpush.bf16.msra.mxu0 0
    %605 = vmatpush.bf16.msra.mxu0 0
    %606 = vmatpush.bf16.msra.mxu0 0
    %607 = vmatpush.bf16.msra.mxu0 0
    %608 = vmatpush.bf16.msra.mxu0 0
    %609 = vmatpush.bf16.msra.mxu0 %v470
    %610 = vmatmul.bf16.gmra.mxu0 %v522
    %v611 = vpop.f32.mrf.mxu0
    %v612 = vadd.f32 %v599, %v611
    %v613 = vpop.f32.mrf.mxu0
    %614 = vdwg.mxu0
    %v615 = vmax.f32 %v612, 0.0
    %v616 = vpack.c.bf16 %v615, %v615
    %v617 = vld [vmem:[#allocation7] sm:$0xf]
    %v618 = vld [vmem:[#allocation7 + $0x4] sm:$0xf]
    %v619 = vld [vmem:[#allocation7 + $0x8] sm:$0xf]
    %v620 = vld [vmem:[#allocation7 + $0xc] sm:$0xf]
    %v621 = vld [vmem:[#allocation7 + $0x10] sm:$0xf]
    %v622 = vld [vmem:[#allocation7 + $0x14] sm:$0xf]
    %v623 = vld [vmem:[#allocation7 + $0x18] sm:$0xf]
    %v624 = vld [vmem:[#allocation7 + $0x1c] sm:$0xf]
    %v625 = vld [vmem:[#allocation7 + $0x20] sm:$0xf]
    %v626 = vld [vmem:[#allocation7 + $0x24] sm:$0xf]
    %v627 = vld [vmem:[#allocation7 + $0x28] sm:$0xf]
    %v628 = vld [vmem:[#allocation7 + $0x2c] sm:$0xf]
    %v629 = vld [vmem:[#allocation7 + $0x30] sm:$0xf]
    %v630 = vld [vmem:[#allocation7 + $0x34] sm:$0xf]
    %v631 = vld [vmem:[#allocation7 + $0x38] sm:$0xf]
    %v632 = vld [vmem:[#allocation7 + $0x3c] sm:$0xf]
    %v633 = vld [vmem:[%s4] sm:$0x1]
    %v635 = vperm.slane %v633, 0
    %v653 = vunpack.c.l.b16 %v617
    %v654 = vunpack.c.l.b16 %v618
    %v655 = vunpack.c.l.b16 %v619
    %v656 = vunpack.c.l.b16 %v620
    %v657 = vunpack.c.l.b16 %v621
    %v658 = vunpack.c.l.b16 %v622
    %v659 = vunpack.c.l.b16 %v623
    %v660 = vunpack.c.l.b16 %v624
    %v661 = vunpack.c.l.b16 %v625
    %v662 = vunpack.c.l.b16 %v626
    %v663 = vunpack.c.l.b16 %v627
    %v664 = vunpack.c.l.b16 %v628
    %v665 = vunpack.c.l.b16 %v629
    %v666 = vunpack.c.l.b16 %v630
    %v667 = vunpack.c.l.b16 %v631
    %v668 = vunpack.c.l.b16 %v632
    %v669 = vpack.c.b16 %v654, %v653
    %v670 = vpack.c.b16 %v656, %v655
    %v671 = vpack.c.b16 %v658, %v657
    %v672 = vpack.c.b16 %v660, %v659
    %v673 = vpack.c.b16 %v662, %v661
    %v674 = vpack.c.b16 %v664, %v663
    %v675 = vpack.c.b16 %v666, %v665
    %v676 = vpack.c.b16 %v668, %v667
    %685 = vmatpush.bf16.msra.mxu0 %v676
    %686 = vmatpush.bf16.msra.mxu0 %v675
    %687 = vmatpush.bf16.msra.mxu0 %v674
    %688 = vmatpush.bf16.msra.mxu0 %v673
    %689 = vmatpush.bf16.msra.mxu0 %v672
    %690 = vmatpush.bf16.msra.mxu0 %v671
    %691 = vmatpush.bf16.msra.mxu0 %v670
    %692 = vmatpush.bf16.msra.mxu0 %v669
    %693 = vmatmul.bf16.gmra.mxu0 %v616
    %v694 = vpop.f32.mrf.mxu0
    %v695 = vadd.f32 %v635, %v694
    %v696 = vpop.f32.mrf.mxu0
    %697 = vdwg.mxu0
    %v698 = vmax.f32 %v695, 0.0
    %v699 = vpack.c.bf16 %v698, %v698
    %v700 = vld [vmem:[#allocation8] sm:$0xf]
    %v701 = vld [vmem:[#allocation8 + $0x4] sm:$0xf]
    %v702 = vld [vmem:[#allocation8 + $0x8] sm:$0xf]
    %v703 = vld [vmem:[#allocation8 + $0xc] sm:$0xf]
    %v704 = vld [vmem:[#allocation8 + $0x10] sm:$0xf]
    %v705 = vld [vmem:[#allocation8 + $0x14] sm:$0xf]
    %v706 = vld [vmem:[#allocation8 + $0x18] sm:$0xf]
    %v707 = vld [vmem:[#allocation8 + $0x1c] sm:$0xf]
    %v708 = vld [vmem:[#allocation8 + $0x20] sm:$0xf]
    %v709 = vld [vmem:[#allocation8 + $0x24] sm:$0xf]
    %v710 = vld [vmem:[#allocation8 + $0x28] sm:$0xf]
    %v711 = vld [vmem:[#allocation8 + $0x2c] sm:$0xf]
    %v712 = vld [vmem:[#allocation8 + $0x30] sm:$0xf]
    %v713 = vld [vmem:[#allocation8 + $0x34] sm:$0xf]
    %v714 = vld [vmem:[#allocation8 + $0x38] sm:$0xf]
    %v715 = vld [vmem:[#allocation8 + $0x3c] sm:$0xf]
    %v716 = vld [vmem:[%s6] sm:$0x1]
    %v718 = vperm.slane %v716, 0
    %v736 = vunpack.c.l.b16 %v700
    %v737 = vunpack.c.l.b16 %v701
    %v738 = vunpack.c.l.b16 %v702
    %v739 = vunpack.c.l.b16 %v703
    %v740 = vunpack.c.l.b16 %v704
    %v741 = vunpack.c.l.b16 %v705
    %v742 = vunpack.c.l.b16 %v706
    %v743 = vunpack.c.l.b16 %v707
    %v744 = vunpack.c.l.b16 %v708
    %v745 = vunpack.c.l.b16 %v709
    %v746 = vunpack.c.l.b16 %v710
    %v747 = vunpack.c.l.b16 %v711
    %v748 = vunpack.c.l.b16 %v712
    %v749 = vunpack.c.l.b16 %v713
    %v750 = vunpack.c.l.b16 %v714
    %v751 = vunpack.c.l.b16 %v715
    %v752 = vpack.c.b16 %v737, %v736
    %v753 = vpack.c.b16 %v739, %v738
    %v754 = vpack.c.b16 %v741, %v740
    %v755 = vpack.c.b16 %v743, %v742
    %v756 = vpack.c.b16 %v745, %v744
    %v757 = vpack.c.b16 %v747, %v746
    %v758 = vpack.c.b16 %v749, %v748
    %v759 = vpack.c.b16 %v751, %v750
    %768 = vmatpush.bf16.msra.mxu0 %v759
    %769 = vmatpush.bf16.msra.mxu0 %v758
    %770 = vmatpush.bf16.msra.mxu0 %v757
    %771 = vmatpush.bf16.msra.mxu0 %v756
    %772 = vmatpush.bf16.msra.mxu0 %v755
    %773 = vmatpush.bf16.msra.mxu0 %v754
    %774 = vmatpush.bf16.msra.mxu0 %v753
    %775 = vmatpush.bf16.msra.mxu0 %v752
    %776 = vmatmul.bf16.gmra.mxu0 %v699
    %v777 = vpop.f32.mrf.mxu0
    %v778 = vadd.f32 %v718, %v777
    %v779 = vpop.f32.mrf.mxu0
    %780 = vdwg.mxu0
    %v781 = vpack.c.bf16 %v778, %v778
    %v782 = vld [vmem:[#allocation10] sm:$0xff]
    %v783 = vld [vmem:[#allocation10 + $0x8] sm:$0xff]
    %v784 = vld [vmem:[#allocation10 + $0x10] sm:$0xff]
    %v785 = vld [vmem:[#allocation10 + $0x18] sm:$0xff]
    %v786 = vld [vmem:[#allocation10 + $0x20] sm:$0xff]
    %v787 = vld [vmem:[#allocation10 + $0x28] sm:$0xff]
    %v788 = vld [vmem:[#allocation10 + $0x30] sm:$0xff]
    %v789 = vld [vmem:[#allocation10 + $0x38] sm:$0xff]
    %v790 = vld [vmem:[#allocation10 + $0x40] sm:$0xff]
    %v791 = vld [vmem:[#allocation10 + $0x48] sm:$0xff]
    %v792 = vld [vmem:[#allocation10 + $0x50] sm:$0xff]
    %v793 = vld [vmem:[#allocation10 + $0x58] sm:$0xff]
    %v794 = vld [vmem:[#allocation10 + $0x60] sm:$0xff]
    %v795 = vld [vmem:[#allocation10 + $0x68] sm:$0xff]
    %v796 = vld [vmem:[#allocation10 + $0x70] sm:$0xff]
    %v797 = vld [vmem:[#allocation10 + $0x78] sm:$0xff]
    %v798 = vld [vmem:[#allocation10 + $0x80] sm:$0xff]
    %v799 = vld [vmem:[#allocation10 + $0x88] sm:$0xff]
    %v800 = vld [vmem:[#allocation10 + $0x90] sm:$0xff]
    %v801 = vld [vmem:[#allocation10 + $0x98] sm:$0xff]
    %v802 = vld [vmem:[#allocation10 + $0xa0] sm:$0xff]
    %v803 = vld [vmem:[#allocation10 + $0xa8] sm:$0xff]
    %v804 = vld [vmem:[#allocation10 + $0xb0] sm:$0xff]
    %v805 = vld [vmem:[#allocation10 + $0xb8] sm:$0xff]
    %v806 = vld [vmem:[#allocation10 + $0xc0] sm:$0xff]
    %v807 = vld [vmem:[#allocation10 + $0xc8] sm:$0xff]
    %v808 = vld [vmem:[#allocation10 + $0xd0] sm:$0xff]
    %v809 = vld [vmem:[#allocation10 + $0xd8] sm:$0xff]
    %v810 = vld [vmem:[#allocation10 + $0xe0] sm:$0xff]
    %v811 = vld [vmem:[#allocation10 + $0xe8] sm:$0xff]
    %v812 = vld [vmem:[#allocation10 + $0xf0] sm:$0xff]
    %v813 = vld [vmem:[#allocation10 + $0xf8] sm:$0xff]
    %v814 = vld [vmem:[%s8] sm:$0xf]
    %v816 = vperm.slane %v814, 0
    %v817 = vperm.slane %v814, 1
    %v818 = vperm.slane %v814, 2
    %v819 = vperm.slane %v814, 3
    %v856 = vunpack.c.l.b16 %v782
    %v857 = vunpack.c.h.b16 %v782
    %v858 = vunpack.c.l.b16 %v783
    %v859 = vunpack.c.h.b16 %v783
    %v860 = vunpack.c.l.b16 %v784
    %v861 = vunpack.c.h.b16 %v784
    %v862 = vunpack.c.l.b16 %v785
    %v863 = vunpack.c.h.b16 %v785
    %v864 = vunpack.c.l.b16 %v786
    %v865 = vunpack.c.h.b16 %v786
    %v866 = vunpack.c.l.b16 %v787
    %v867 = vunpack.c.h.b16 %v787
    %v868 = vunpack.c.l.b16 %v788
    %v869 = vunpack.c.h.b16 %v788
    %v870 = vunpack.c.l.b16 %v789
    %v871 = vunpack.c.h.b16 %v789
    %v872 = vunpack.c.l.b16 %v790
    %v873 = vunpack.c.h.b16 %v790
    %v874 = vunpack.c.l.b16 %v791
    %v875 = vunpack.c.h.b16 %v791
    %v876 = vunpack.c.l.b16 %v792
    %v877 = vunpack.c.h.b16 %v792
    %v878 = vunpack.c.l.b16 %v793
    %v879 = vunpack.c.h.b16 %v793
    %v880 = vunpack.c.l.b16 %v794
    %v881 = vunpack.c.h.b16 %v794
    %v882 = vunpack.c.l.b16 %v795
    %v883 = vunpack.c.h.b16 %v795
    %v884 = vunpack.c.l.b16 %v796
    %v885 = vunpack.c.h.b16 %v796
    %v886 = vunpack.c.l.b16 %v797
    %v887 = vunpack.c.h.b16 %v797
    %v888 = vunpack.c.l.b16 %v798
    %v889 = vunpack.c.h.b16 %v798
    %v890 = vunpack.c.l.b16 %v799
    %v891 = vunpack.c.h.b16 %v799
    %v892 = vunpack.c.l.b16 %v800
    %v893 = vunpack.c.h.b16 %v800
    %v894 = vunpack.c.l.b16 %v801
    %v895 = vunpack.c.h.b16 %v801
    %v896 = vunpack.c.l.b16 %v802
    %v897 = vunpack.c.h.b16 %v802
    %v898 = vunpack.c.l.b16 %v803
    %v899 = vunpack.c.h.b16 %v803
    %v900 = vunpack.c.l.b16 %v804
    %v901 = vunpack.c.h.b16 %v804
    %v902 = vunpack.c.l.b16 %v805
    %v903 = vunpack.c.h.b16 %v805
    %v904 = vunpack.c.l.b16 %v806
    %v905 = vunpack.c.h.b16 %v806
    %v906 = vunpack.c.l.b16 %v807
    %v907 = vunpack.c.h.b16 %v807
    %v908 = vunpack.c.l.b16 %v808
    %v909 = vunpack.c.h.b16 %v808
    %v910 = vunpack.c.l.b16 %v809
    %v911 = vunpack.c.h.b16 %v809
    %v912 = vunpack.c.l.b16 %v810
    %v913 = vunpack.c.h.b16 %v810
    %v914 = vunpack.c.l.b16 %v811
    %v915 = vunpack.c.h.b16 %v811
    %v916 = vunpack.c.l.b16 %v812
    %v917 = vunpack.c.h.b16 %v812
    %v918 = vunpack.c.l.b16 %v813
    %v919 = vunpack.c.h.b16 %v813
    %v920 = vpack.c.b16 %v860, %v856
    %v921 = vpack.c.b16 %v861, %v857
    %v922 = vpack.c.b16 %v862, %v858
    %v923 = vpack.c.b16 %v863, %v859
    %v924 = vpack.c.b16 %v868, %v864
    %v925 = vpack.c.b16 %v869, %v865
    %v926 = vpack.c.b16 %v870, %v866
    %v927 = vpack.c.b16 %v871, %v867
    %v928 = vpack.c.b16 %v876, %v872
    %v929 = vpack.c.b16 %v877, %v873
    %v930 = vpack.c.b16 %v878, %v874
    %v931 = vpack.c.b16 %v879, %v875
    %v932 = vpack.c.b16 %v884, %v880
    %v933 = vpack.c.b16 %v885, %v881
    %v934 = vpack.c.b16 %v886, %v882
    %v935 = vpack.c.b16 %v887, %v883
    %v936 = vpack.c.b16 %v892, %v888
    %v937 = vpack.c.b16 %v893, %v889
    %v938 = vpack.c.b16 %v894, %v890
    %v939 = vpack.c.b16 %v895, %v891
    %v940 = vpack.c.b16 %v900, %v896
    %v941 = vpack.c.b16 %v901, %v897
    %v942 = vpack.c.b16 %v902, %v898
    %v943 = vpack.c.b16 %v903, %v899
    %v944 = vpack.c.b16 %v908, %v904
    %v945 = vpack.c.b16 %v909, %v905
    %v946 = vpack.c.b16 %v910, %v906
    %v947 = vpack.c.b16 %v911, %v907
    %v948 = vpack.c.b16 %v916, %v912
    %v949 = vpack.c.b16 %v917, %v913
    %v950 = vpack.c.b16 %v918, %v914
    %v951 = vpack.c.b16 %v919, %v915
    %984 = vmatpush.bf16.msra.mxu0 %v948
    %985 = vmatpush.bf16.msra.mxu0 %v944
    %986 = vmatpush.bf16.msra.mxu0 %v940
    %987 = vmatpush.bf16.msra.mxu0 %v936
    %988 = vmatpush.bf16.msra.mxu0 %v932
    %989 = vmatpush.bf16.msra.mxu0 %v928
    %990 = vmatpush.bf16.msra.mxu0 %v924
    %991 = vmatpush.bf16.msra.mxu0 %v920
    %992 = vmatmul.bf16.gmra.mxu0 %v781
    %v993 = vpop.f32.mrf.mxu0
    %v994 = vadd.f32 %v816, %v993
    %v995 = vpop.f32.mrf.mxu0
    %996 = vdwg.mxu0
    %997 = vmatpush.bf16.msra.mxu0 %v949
    %998 = vmatpush.bf16.msra.mxu0 %v945
    %999 = vmatpush.bf16.msra.mxu0 %v941
    %1000 = vmatpush.bf16.msra.mxu0 %v937
    %1001 = vmatpush.bf16.msra.mxu0 %v933
    %1002 = vmatpush.bf16.msra.mxu0 %v929
    %1003 = vmatpush.bf16.msra.mxu0 %v925
    %1004 = vmatpush.bf16.msra.mxu0 %v921
    %1005 = vmatmul.bf16.gmra.mxu0 %v781
    %v1006 = vpop.f32.mrf.mxu0
    %v1007 = vadd.f32 %v817, %v1006
    %v1008 = vpop.f32.mrf.mxu0
    %1009 = vdwg.mxu0
    %1010 = vmatpush.bf16.msra.mxu0 %v950
    %1011 = vmatpush.bf16.msra.mxu0 %v946
    %1012 = vmatpush.bf16.msra.mxu0 %v942
    %1013 = vmatpush.bf16.msra.mxu0 %v938
    %1014 = vmatpush.bf16.msra.mxu0 %v934
    %1015 = vmatpush.bf16.msra.mxu0 %v930
    %1016 = vmatpush.bf16.msra.mxu0 %v926
    %1017 = vmatpush.bf16.msra.mxu0 %v922
    %1018 = vmatmul.bf16.gmra.mxu0 %v781
    %v1019 = vpop.f32.mrf.mxu0
    %v1020 = vadd.f32 %v818, %v1019
    %v1021 = vpop.f32.mrf.mxu0
    %1022 = vdwg.mxu0
    %1023 = vmatpush.bf16.msra.mxu0 %v951
    %1024 = vmatpush.bf16.msra.mxu0 %v947
    %1025 = vmatpush.bf16.msra.mxu0 %v943
    %1026 = vmatpush.bf16.msra.mxu0 %v939
    %1027 = vmatpush.bf16.msra.mxu0 %v935
    %1028 = vmatpush.bf16.msra.mxu0 %v931
    %1029 = vmatpush.bf16.msra.mxu0 %v927
    %1030 = vmatpush.bf16.msra.mxu0 %v923
    %1031 = vmatmul.bf16.gmra.mxu0 %v781
    %v1032 = vpop.f32.mrf.mxu0
    %v1033 = vadd.f32 %v819, %v1032
    %v1034 = vpop.f32.mrf.mxu0
    %1035 = vdwg.mxu0
    %v1036 = vmax.f32 %v994, %v1007
    %v1037 = vmax.f32 %v1036, %v1020
    %v1038 = vmax.f32 %v1037, %v1033
    %v1039 = vpack.c.bf16 %v1038, %v1038
    %1040 = vst [vmem:[#allocation11] sm:$0xf] %v1039
    // Predicated region
    $region58: #{branch_second_net_forward.1} parent=1 // pred_check
      _
    $region59: #{branch_second_net_forward.1} parent=1 // pred_check_branch
      %1042 = sbr.rel (0) target = $region61
    $region60: #{branch_second_net_forward.1} parent=1 // pred_region
      %1044 = vsyncadd [#allocation4], 0
      %s1046 = sshll.u32 [#allocation11], 4
      %s1047 = int_to_ptr.vmem [resolvable:$true] %s1046
      %s1048 = sshll.u32 %s9, 4
      %s1049 = int_to_ptr.hbm [resolvable:$true] %s1048
      %1051 = dma.vmem_to_hbm [thread:$0]  %s1047, 64, %s1049, [#allocation4]
    $region61: #{branch_second_net_forward.1} parent=1 // pred_fallthru
      _
    // Predicated region
    $region62: #{branch_second_net_forward.1} parent=1 // pred_check
      _
    $region63: #{branch_second_net_forward.1} parent=1 // pred_check_branch
      %1053 = sbr.rel (0) target = $region65
    $region64: #{branch_second_net_forward.1} parent=1 // pred_region
      %1055 = dma.done [#allocation4], 64
    $region65: #{branch_second_net_forward.1} parent=1 // pred_fallthru
      _
    %1056 = vsyncpa [#allocation3], 1
    %1057 = vsyncpa [#allocation6], 1
    %1058 = vsyncpa [#allocation9], 1
    %1059 = vsyncpa [#allocation4], 1

</llo_original>
